<compile_context>
chip_gen: v5e
topology: v5e:2x2
jax: 0.10.0
libtpu: 0.0.40
codegen_flags: <defaults>
</compile_context>

<pallas_src>
import jax
import jax.numpy as jnp
from jax.experimental import pallas as pl
from jax.experimental.pallas import tpu as pltpu

SIZE_IN = 7
SIZE_H1 = 100
SIZE_H2 = 50
SIZE_H3 = 10
SIZE_OUT = 1

DEFAULT_TILE_B = 1024  # batch rows per grid step (lanes in transposed layout)


def _mlp_kernel(x_ref,
                w1_ref, b1_ref,
                w2_ref, b2_ref,
                w3_ref, b3_ref,
                w4_ref, b4_ref,
                o_ref):
    # Transposed layout:
    #   x_ref : [7,   TILE_B]
    #   wN    : [out, in]  (PyTorch-native nn.Linear layout)
    #   bN    : [out, 1]
    #   h     : [out, TILE_B]
    x = x_ref[...]
    h = jnp.tanh(
        jnp.dot(w1_ref[...], x, preferred_element_type=jnp.float32)
        + b1_ref[...])
    h = jnp.tanh(
        jnp.dot(w2_ref[...], h, preferred_element_type=jnp.float32)
        + b2_ref[...])
    h = jnp.tanh(
        jnp.dot(w3_ref[...], h, preferred_element_type=jnp.float32)
        + b3_ref[...])
    # lin_last (no activation); [1, TILE_B] lane-dense store
    o_ref[...] = (
        jnp.dot(w4_ref[...], h, preferred_element_type=jnp.float32)
        + b4_ref[...])


def satellite_model_forward(x, params, tile_b=DEFAULT_TILE_B):
    """x: [B, 7] float32, params: list of (W[out,in], b[out,1]). Returns [B, 1]."""
    (w1, b1), (w2, b2), (w3, b3), (w4, b4) = params
    B = x.shape[0]

    # Shrink the tile for tiny batches; lane extent must be a multiple of 128.
    tile_b = min(tile_b, max(128, pl.cdiv(B, 128) * 128))
    num_tiles = pl.cdiv(B, tile_b)
    padded_B = num_tiles * tile_b

    # features-on-sublanes / batch-on-lanes; pad batch up to a tile boundary.
    xt = x.T
    if padded_B != B:
        xt = jnp.pad(xt, ((0, 0), (0, padded_B - B)))

    def const_spec(shape):
        # Same block every grid step -> weights/biases stay VMEM-resident.
        return pl.BlockSpec(shape, lambda i: (0, 0))

    out_t = pl.pallas_call(
        _mlp_kernel,
        out_shape=jax.ShapeDtypeStruct((SIZE_OUT, padded_B), jnp.float32),
        grid=(num_tiles,),
        in_specs=[
            pl.BlockSpec((SIZE_IN, tile_b), lambda i: (0, i)),   # x^T batch tile
            const_spec((SIZE_H1, SIZE_IN)),  const_spec((SIZE_H1, 1)),
            const_spec((SIZE_H2, SIZE_H1)),  const_spec((SIZE_H2, 1)),
            const_spec((SIZE_H3, SIZE_H2)),  const_spec((SIZE_H3, 1)),
            const_spec((SIZE_OUT, SIZE_H3)), const_spec((SIZE_OUT, 1)),
        ],
        out_specs=pl.BlockSpec((SIZE_OUT, tile_b), lambda i: (0, i)),
        compiler_params=pltpu.CompilerParams(
            dimension_semantics=("parallel",)),
    )(xt, w1, b1, w2, b2, w3, b3, w4, b4)

    # Drop batch padding and return [B, 1] like the PyTorch module.
    return out_t[:, :B].T


def init_params(key):
    """PyTorch nn.Linear-style init: U(-1/sqrt(fan_in), 1/sqrt(fan_in)).
    Weights kept in PyTorch-native [out, in]; biases as [out, 1]."""
    dims = [(SIZE_IN, SIZE_H1), (SIZE_H1, SIZE_H2),
            (SIZE_H2, SIZE_H3), (SIZE_H3, SIZE_OUT)]
    params = []
    for fan_in, fan_out in dims:
        key, kw, kb = jax.random.split(key, 3)
        bound = 1.0 / jnp.sqrt(float(fan_in))
        w = jax.random.uniform(kw, (fan_out, fan_in), jnp.float32,
                               minval=-bound, maxval=bound)
        b = jax.random.uniform(kb, (fan_out, 1), jnp.float32,
                               minval=-bound, maxval=bound)
        params.append((w, b))
    return params


def reference_forward(x, params):
    """Pure-JAX reference matching PyTorch semantics (y = x @ W.T + b)."""
    (w1, b1), (w2, b2), (w3, b3), (w4, b4) = params
    h = jnp.tanh(x @ w1.T + b1[:, 0])
    h = jnp.tanh(h @ w2.T + b2[:, 0])
    h = jnp.tanh(h @ w3.T + b3[:, 0])
    return h @ w4.T + b4[:, 0]


if __name__ == "__main__":
    key = jax.random.PRNGKey(0)
    key, kx = jax.random.split(key)

    batch = 8
    x = jax.random.normal(kx, (batch, SIZE_IN), dtype=jnp.float32)

    params = init_params(key)

    out = satellite_model_forward(x, params)
    out = jax.block_until_ready(out)

    ref = reference_forward(x, params)
    assert out.shape == (batch, SIZE_OUT)
    assert jnp.allclose(out, ref, atol=1e-5, rtol=1e-5)

    print("KERNEL_OK")
</pallas_src>

<mosaic_0001>
module attributes {stable_mosaic.version = 11 : i64} {
  func.func @_mlp_kernel(%arg0: i32, %arg1: memref<7x128xf32, #tpu.memory_space<vmem>>, %arg2: memref<100x7xf32, #tpu.memory_space<vmem>>, %arg3: memref<100x1xf32, #tpu.memory_space<vmem>>, %arg4: memref<50x100xf32, #tpu.memory_space<vmem>>, %arg5: memref<50x1xf32, #tpu.memory_space<vmem>>, %arg6: memref<10x50xf32, #tpu.memory_space<vmem>>, %arg7: memref<10x1xf32, #tpu.memory_space<vmem>>, %arg8: memref<1x10xf32, #tpu.memory_space<vmem>>, %arg9: memref<1x1xf32, #tpu.memory_space<vmem>>, %arg10: memref<1x128xf32, #tpu.memory_space<vmem>>) attributes {dimension_semantics = [#tpu.dimension_semantics<parallel>], iteration_bounds = array<i64: 1>, scalar_prefetch = 0 : i64, scratch_operands = 0 : i64, tpu.core_type = #tpu.core_type<tc>, window_params = [{transform_indices = @transform_0, window_bounds = array<i64: 7, 128>}, {pipeline_mode = #tpu.pipeline_mode<synchronous>, transform_indices = @transform_1, window_bounds = array<i64: 100, 7>}, {pipeline_mode = #tpu.pipeline_mode<synchronous>, transform_indices = @transform_2, window_bounds = array<i64: 100, 1>}, {pipeline_mode = #tpu.pipeline_mode<synchronous>, transform_indices = @transform_3, window_bounds = array<i64: 50, 100>}, {pipeline_mode = #tpu.pipeline_mode<synchronous>, transform_indices = @transform_4, window_bounds = array<i64: 50, 1>}, {pipeline_mode = #tpu.pipeline_mode<synchronous>, transform_indices = @transform_5, window_bounds = array<i64: 10, 50>}, {pipeline_mode = #tpu.pipeline_mode<synchronous>, transform_indices = @transform_6, window_bounds = array<i64: 10, 1>}, {pipeline_mode = #tpu.pipeline_mode<synchronous>, transform_indices = @transform_7, window_bounds = array<i64: 1, 10>}, {pipeline_mode = #tpu.pipeline_mode<synchronous>, transform_indices = @transform_8, window_bounds = array<i64: 1, 1>}, {transform_indices = @transform_9, window_bounds = array<i64: 1, 128>}]} {
    %c0 = arith.constant 0 : index
    %c0_0 = arith.constant 0 : index
    %0 = vector.load %arg1[%c0, %c0_0] : memref<7x128xf32, #tpu.memory_space<vmem>>, vector<7x128xf32>
    %c0_1 = arith.constant 0 : index
    %c0_2 = arith.constant 0 : index
    %1 = vector.load %arg2[%c0_1, %c0_2] : memref<100x7xf32, #tpu.memory_space<vmem>>, vector<100x7xf32>
    %cst = arith.constant dense<0.000000e+00> : vector<100x128xf32>
    %2 = tpu.matmul %1, %0, %cst {dimension_numbers = #tpu.dot_dimension_numbers<[1], [0], [0], [1], [0, 0, 1, 1], [], []>} : vector<100x7xf32>, vector<7x128xf32>, vector<100x128xf32> -> vector<100x128xf32>
    %c0_3 = arith.constant 0 : index
    %c0_4 = arith.constant 0 : index
    %3 = vector.load %arg3[%c0_3, %c0_4] : memref<100x1xf32, #tpu.memory_space<vmem>>, vector<100x1xf32>
    %4 = vector.broadcast %3 : vector<100x1xf32> to vector<100x128xf32>
    %5 = arith.addf %2, %4 : vector<100x128xf32>
    %6 = math.tanh %5 : vector<100x128xf32>
    %c0_5 = arith.constant 0 : index
    %c0_6 = arith.constant 0 : index
    %7 = vector.load %arg4[%c0_5, %c0_6] : memref<50x100xf32, #tpu.memory_space<vmem>>, vector<50x100xf32>
    %cst_7 = arith.constant dense<0.000000e+00> : vector<50x128xf32>
    %8 = tpu.matmul %7, %6, %cst_7 {dimension_numbers = #tpu.dot_dimension_numbers<[1], [0], [0], [1], [0, 0, 1, 1], [], []>} : vector<50x100xf32>, vector<100x128xf32>, vector<50x128xf32> -> vector<50x128xf32>
    %c0_8 = arith.constant 0 : index
    %c0_9 = arith.constant 0 : index
    %9 = vector.load %arg5[%c0_8, %c0_9] : memref<50x1xf32, #tpu.memory_space<vmem>>, vector<50x1xf32>
    %10 = vector.broadcast %9 : vector<50x1xf32> to vector<50x128xf32>
    %11 = arith.addf %8, %10 : vector<50x128xf32>
    %12 = math.tanh %11 : vector<50x128xf32>
    %c0_10 = arith.constant 0 : index
    %c0_11 = arith.constant 0 : index
    %13 = vector.load %arg6[%c0_10, %c0_11] : memref<10x50xf32, #tpu.memory_space<vmem>>, vector<10x50xf32>
    %cst_12 = arith.constant dense<0.000000e+00> : vector<10x128xf32>
    %14 = tpu.matmul %13, %12, %cst_12 {dimension_numbers = #tpu.dot_dimension_numbers<[1], [0], [0], [1], [0, 0, 1, 1], [], []>} : vector<10x50xf32>, vector<50x128xf32>, vector<10x128xf32> -> vector<10x128xf32>
    %c0_13 = arith.constant 0 : index
    %c0_14 = arith.constant 0 : index
    %15 = vector.load %arg7[%c0_13, %c0_14] : memref<10x1xf32, #tpu.memory_space<vmem>>, vector<10x1xf32>
    %16 = vector.broadcast %15 : vector<10x1xf32> to vector<10x128xf32>
    %17 = arith.addf %14, %16 : vector<10x128xf32>
    %18 = math.tanh %17 : vector<10x128xf32>
    %c0_15 = arith.constant 0 : index
    %c0_16 = arith.constant 0 : index
    %19 = vector.load %arg8[%c0_15, %c0_16] : memref<1x10xf32, #tpu.memory_space<vmem>>, vector<1x10xf32>
    %cst_17 = arith.constant dense<0.000000e+00> : vector<1x128xf32>
    %20 = tpu.matmul %19, %18, %cst_17 {dimension_numbers = #tpu.dot_dimension_numbers<[1], [0], [0], [1], [0, 0, 1, 1], [], []>} : vector<1x10xf32>, vector<10x128xf32>, vector<1x128xf32> -> vector<1x128xf32>
    %c0_18 = arith.constant 0 : index
    %c0_19 = arith.constant 0 : index
    %21 = vector.load %arg9[%c0_18, %c0_19] : memref<1x1xf32, #tpu.memory_space<vmem>>, vector<1x1xf32>
    %22 = vector.broadcast %21 : vector<1x1xf32> to vector<1x128xf32>
    %23 = arith.addf %20, %22 : vector<1x128xf32>
    %c0_20 = arith.constant 0 : index
    %c0_21 = arith.constant 0 : index
    %24 = vector.load %arg10[%c0_20, %c0_21] : memref<1x128xf32, #tpu.memory_space<vmem>>, vector<1x128xf32>
    tpu.vector_store %arg10[%c0_20, %c0_21], %23 {strides = array<i32>} : memref<1x128xf32, #tpu.memory_space<vmem>>, vector<1x128xf32>,
    return
  }
  func.func @transform_0(%arg0: i32) -> (i32, i32) {
    %c0_i32 = arith.constant 0 : i32
    %c0_i32_0 = arith.constant 0 : i32
    return %c0_i32, %arg0 : i32, i32
  }
  func.func @transform_1(%arg0: i32) -> (i32, i32) {
    %c0_i32 = arith.constant 0 : i32
    %c0_i32_0 = arith.constant 0 : i32
    %c0_i32_1 = arith.constant 0 : i32
    return %c0_i32, %c0_i32_0 : i32, i32
  }
  func.func @transform_2(%arg0: i32) -> (i32, i32) {
    %c0_i32 = arith.constant 0 : i32
    %c0_i32_0 = arith.constant 0 : i32
    %c0_i32_1 = arith.constant 0 : i32
    return %c0_i32, %c0_i32_0 : i32, i32
  }
  func.func @transform_3(%arg0: i32) -> (i32, i32) {
    %c0_i32 = arith.constant 0 : i32
    %c0_i32_0 = arith.constant 0 : i32
    %c0_i32_1 = arith.constant 0 : i32
    return %c0_i32, %c0_i32_0 : i32, i32
  }
  func.func @transform_4(%arg0: i32) -> (i32, i32) {
    %c0_i32 = arith.constant 0 : i32
    %c0_i32_0 = arith.constant 0 : i32
    %c0_i32_1 = arith.constant 0 : i32
    return %c0_i32, %c0_i32_0 : i32, i32
  }
  func.func @transform_5(%arg0: i32) -> (i32, i32) {
    %c0_i32 = arith.constant 0 : i32
    %c0_i32_0 = arith.constant 0 : i32
    %c0_i32_1 = arith.constant 0 : i32
    return %c0_i32, %c0_i32_0 : i32, i32
  }
  func.func @transform_6(%arg0: i32) -> (i32, i32) {
    %c0_i32 = arith.constant 0 : i32
    %c0_i32_0 = arith.constant 0 : i32
    %c0_i32_1 = arith.constant 0 : i32
    return %c0_i32, %c0_i32_0 : i32, i32
  }
  func.func @transform_7(%arg0: i32) -> (i32, i32) {
    %c0_i32 = arith.constant 0 : i32
    %c0_i32_0 = arith.constant 0 : i32
    %c0_i32_1 = arith.constant 0 : i32
    return %c0_i32, %c0_i32_0 : i32, i32
  }
  func.func @transform_8(%arg0: i32) -> (i32, i32) {
    %c0_i32 = arith.constant 0 : i32
    %c0_i32_0 = arith.constant 0 : i32
    %c0_i32_1 = arith.constant 0 : i32
    return %c0_i32, %c0_i32_0 : i32, i32
  }
  func.func @transform_9(%arg0: i32) -> (i32, i32) {
    %c0_i32 = arith.constant 0 : i32
    %c0_i32_0 = arith.constant 0 : i32
    return %c0_i32, %arg0 : i32, i32
  }
}

</mosaic_0001>

<llo_original>
// kernel: tpu_custom_call.1
$region0: #{tpu_custom_call.1}
  #allocation0 [shape = 'u32[]', space=smem, size = 0x4, offset = 0x4, fixed_abs, tag = 'smem constant byte address 0x4 - core index']
  #allocation1 [shape = 'u32[72,128]{1,0:T(1,128)}', space=vmem, size = 0x9000, scoped, tag = 'internal scratch']
  #allocation2 [shape = 'f32[1,1]{1,0:T(1,128)S(1)}', space=vmem, size = 0x200, scoped, tag = 'scoped memory for tpu_custom_call.1']
  %s0 = inlined_call_operand.vmem [shape: f32[7,128], index: 0, kind: input, shape index: {}]
  %s1 = inlined_call_operand.vmem [shape: f32[100,7], index: 1, kind: input, shape index: {}]
  %s2 = inlined_call_operand.vmem [shape: f32[100,1], index: 2, kind: input, shape index: {}]
  %s3 = inlined_call_operand.vmem [shape: f32[50,100], index: 3, kind: input, shape index: {}]
  %s4 = inlined_call_operand.vmem [shape: f32[50,1], index: 4, kind: input, shape index: {}]
  %s5 = inlined_call_operand.vmem [shape: f32[10,50], index: 5, kind: input, shape index: {}]
  %s6 = inlined_call_operand.vmem [shape: f32[10,1], index: 6, kind: input, shape index: {}]
  %s7 = inlined_call_operand.vmem [shape: f32[1,10], index: 7, kind: input, shape index: {}]
  %s8 = inlined_call_operand.<no memory space> [shape: f32[1,1], index: 8, kind: input, shape index: {}]
  %s9 = inlined_call_operand.hbm [shape: f32[1,128], index: 9, kind: output, shape index: {}]
  %s10 = sld [smem:[#allocation0]]
  $region46: #{tpu_custom_call.1} parent=0
    _
  %s12 = ssub.s32 1, %s10
  %s13 = scalar_select 0, %s12, %s10
  %v14 = vstv %s8
  %15 = vst [vmem:[#allocation2] sm:$0x1] %v14
  $region1: #{tpu_custom_call.1} parent=0
    #allocation3 [shape = 'u8[512]{0}', space=vmem, size = 0x400, scoped, tag = 'output window, operand 0, single buffered']
    #allocation4 [shape = 's32[1]{0}', space=sflag, size = 0x4, scoped, tag = 'scoped memory for tpu_custom_call.1']
    %16 = vsyncpa [#allocation4], 0
    // Predicated region
    $region2: #{tpu_custom_call.1} parent=1 // pred_check
      _
    $region3: #{tpu_custom_call.1} parent=1 // pred_check_branch
      %18 = sbr.rel (0) target = $region5
    $region4: #{tpu_custom_call.1} parent=1 // pred_region
      _
    $region5: #{tpu_custom_call.1} parent=1 // pred_fallthru
      _
    // Predicated region
    $region6: #{tpu_custom_call.1} parent=1 // pred_check
      _
    $region7: #{tpu_custom_call.1} parent=1 // pred_check_branch
      %20 = sbr.rel (0) target = $region9
    $region8: #{tpu_custom_call.1} parent=1 // pred_region
      _
    $region9: #{tpu_custom_call.1} parent=1 // pred_fallthru
      _
    // Predicated region
    $region10: #{tpu_custom_call.1} parent=1 // pred_check
      _
    $region11: #{tpu_custom_call.1} parent=1 // pred_check_branch
      %22 = sbr.rel (0) target = $region13
    $region12: #{tpu_custom_call.1} parent=1 // pred_region
      _
    $region13: #{tpu_custom_call.1} parent=1 // pred_fallthru
      _
    // Predicated region
    $region14: #{tpu_custom_call.1} parent=1 // pred_check
      _
    $region15: #{tpu_custom_call.1} parent=1 // pred_check_branch
      %24 = sbr.rel (0) target = $region17
    $region16: #{tpu_custom_call.1} parent=1 // pred_region
      _
    $region17: #{tpu_custom_call.1} parent=1 // pred_fallthru
      _
    // Predicated region
    $region18: #{tpu_custom_call.1} parent=1 // pred_check
      _
    $region19: #{tpu_custom_call.1} parent=1 // pred_check_branch
      %26 = sbr.rel (0) target = $region21
    $region20: #{tpu_custom_call.1} parent=1 // pred_region
      _
    $region21: #{tpu_custom_call.1} parent=1 // pred_fallthru
      _
    // Predicated region
    $region22: #{tpu_custom_call.1} parent=1 // pred_check
      _
    $region23: #{tpu_custom_call.1} parent=1 // pred_check_branch
      %28 = sbr.rel (0) target = $region25
    $region24: #{tpu_custom_call.1} parent=1 // pred_region
      _
    $region25: #{tpu_custom_call.1} parent=1 // pred_fallthru
      _
    // Predicated region
    $region26: #{tpu_custom_call.1} parent=1 // pred_check
      _
    $region27: #{tpu_custom_call.1} parent=1 // pred_check_branch
      %30 = sbr.rel (0) target = $region29
    $region28: #{tpu_custom_call.1} parent=1 // pred_region
      _
    $region29: #{tpu_custom_call.1} parent=1 // pred_fallthru
      _
    // Predicated region
    $region30: #{tpu_custom_call.1} parent=1 // pred_check
      _
    $region31: #{tpu_custom_call.1} parent=1 // pred_check_branch
      %32 = sbr.rel (0) target = $region33
    $region32: #{tpu_custom_call.1} parent=1 // pred_region
      _
    $region33: #{tpu_custom_call.1} parent=1 // pred_fallthru
      _
    // Predicated region
    $region34: #{tpu_custom_call.1} parent=1 // pred_check
      _
    $region35: #{tpu_custom_call.1} parent=1 // pred_check_branch
      %34 = sbr.rel (0) target = $region37
    $region36: #{tpu_custom_call.1} parent=1 // pred_region
      _
    $region37: #{tpu_custom_call.1} parent=1 // pred_fallthru
      _
    %v35 = vld [vmem:[%s0] sm:$0x7f]
    %v36 = vld [vmem:[%s1] sm:$0xff]
    %v37 = vld [vmem:[%s1 + $0x8] sm:$0xff]
    %v38 = vld [vmem:[%s1 + $0x10] sm:$0xff]
    %v39 = vld [vmem:[%s1 + $0x18] sm:$0xff]
    %v40 = vld [vmem:[%s1 + $0x20] sm:$0xff]
    %v41 = vld [vmem:[%s1 + $0x28] sm:$0xff]
    %v42 = vld [vmem:[%s1 + $0x30] sm:$0xff]
    %v43 = vld [vmem:[%s1 + $0x38] sm:$0xff]
    %v44 = vld [vmem:[%s1 + $0x40] sm:$0xff]
    %v45 = vld [vmem:[%s1 + $0x48] sm:$0xff]
    %v46 = vld [vmem:[%s1 + $0x50] sm:$0xff]
    %v47 = vld [vmem:[%s1 + $0x58] sm:$0xff]
    %v48 = vld [vmem:[%s1 + $0x60] sm:$0xf]
    %v49 = vld [vmem:[%s2] sm:$0xff]
    %v50 = vld [vmem:[%s2 + $0x8] sm:$0xff]
    %v51 = vld [vmem:[%s2 + $0x10] sm:$0xff]
    %v52 = vld [vmem:[%s2 + $0x18] sm:$0xff]
    %v53 = vld [vmem:[%s2 + $0x20] sm:$0xff]
    %v54 = vld [vmem:[%s2 + $0x28] sm:$0xff]
    %v55 = vld [vmem:[%s2 + $0x30] sm:$0xff]
    %v56 = vld [vmem:[%s2 + $0x38] sm:$0xff]
    %v57 = vld [vmem:[%s2 + $0x40] sm:$0xff]
    %v58 = vld [vmem:[%s2 + $0x48] sm:$0xff]
    %v59 = vld [vmem:[%s2 + $0x50] sm:$0xff]
    %v60 = vld [vmem:[%s2 + $0x58] sm:$0xff]
    %v61 = vld [vmem:[%s2 + $0x60] sm:$0xf]
    %63 = vset.pattern.permute.xlu0 0
    %64 = vperm.xlu0 %63, %v49
    %v65 = vpop.permute.xlu0 %64
    %68 = vset.pattern.permute.xlu0 0
    %69 = vperm.xlu0 %68, %v50
    %v70 = vpop.permute.xlu0 %69
    %73 = vset.pattern.permute.xlu0 0
    %74 = vperm.xlu0 %73, %v51
    %v75 = vpop.permute.xlu0 %74
    %78 = vset.pattern.permute.xlu0 0
    %79 = vperm.xlu0 %78, %v52
    %v80 = vpop.permute.xlu0 %79
    %83 = vset.pattern.permute.xlu0 0
    %84 = vperm.xlu0 %83, %v53
    %v85 = vpop.permute.xlu0 %84
    %88 = vset.pattern.permute.xlu0 0
    %89 = vperm.xlu0 %88, %v54
    %v90 = vpop.permute.xlu0 %89
    %93 = vset.pattern.permute.xlu0 0
    %94 = vperm.xlu0 %93, %v55
    %v95 = vpop.permute.xlu0 %94
    %98 = vset.pattern.permute.xlu0 0
    %99 = vperm.xlu0 %98, %v56
    %v100 = vpop.permute.xlu0 %99
    %103 = vset.pattern.permute.xlu0 0
    %104 = vperm.xlu0 %103, %v57
    %v105 = vpop.permute.xlu0 %104
    %108 = vset.pattern.permute.xlu0 0
    %109 = vperm.xlu0 %108, %v58
    %v110 = vpop.permute.xlu0 %109
    %113 = vset.pattern.permute.xlu0 0
    %114 = vperm.xlu0 %113, %v59
    %v115 = vpop.permute.xlu0 %114
    %118 = vset.pattern.permute.xlu0 0
    %119 = vperm.xlu0 %118, %v60
    %v120 = vpop.permute.xlu0 %119
    %123 = vset.pattern.permute.xlu0 0
    %124 = vperm.xlu0 %123, %v61
    %v125 = vpop.permute.xlu0 %124
    %vm127 = vcmask 56320
    %v129 = vsel %vm127, %v36, 0
    %v132 = vsel %vm127, %v37, 0
    %v135 = vsel %vm127, %v38, 0
    %v138 = vsel %vm127, %v39, 0
    %v141 = vsel %vm127, %v40, 0
    %v144 = vsel %vm127, %v41, 0
    %v147 = vsel %vm127, %v42, 0
    %v150 = vsel %vm127, %v43, 0
    %v153 = vsel %vm127, %v44, 0
    %v156 = vsel %vm127, %v45, 0
    %v159 = vsel %vm127, %v46, 0
    %v162 = vsel %vm127, %v47, 0
    %v165 = vsel %vm127, %v48, 0
    %vm167 = vcmask 1046528
    %v169 = vsel %vm167, %v35, 0
    %171 = vmatpush.msra.mxu0 0.0
    %172 = vmatpush.msra.mxu0 0.0
    %173 = vmatpush.msra.mxu0 0.0
    %174 = vmatpush.msra.mxu0 0.0
    %175 = vmatpush.msra.mxu0 0.0
    %176 = vmatpush.msra.mxu0 0.0
    %177 = vmatpush.msra.mxu0 0.0
    %178 = vmatpush.msra.mxu0 0.0
    %179 = vmatpush.msra.mxu0 0.0
    %180 = vmatpush.msra.mxu0 0.0
    %181 = vmatpush.msra.mxu0 0.0
    %182 = vmatpush.msra.mxu0 0.0
    %183 = vmatpush.msra.mxu0 0.0
    %184 = vmatpush.msra.mxu0 0.0
    %185 = vmatpush.msra.mxu0 0.0
    %186 = vmatpush.msra.mxu0 %v169
    %187 = vmatmul.f32.gmra.mxu0 %v129
    %v188 = vpop.f32.mrf.mxu0
    %v189 = vadd.f32 %v65, %v188
    %190 = vmatmul.f32.gmra.mxu0 %v132
    %v191 = vpop.f32.mrf.mxu0
    %v192 = vadd.f32 %v70, %v191
    %193 = vmatmul.f32.gmra.mxu0 %v135
    %v194 = vpop.f32.mrf.mxu0
    %v195 = vadd.f32 %v75, %v194
    %196 = vmatmul.f32.gmra.mxu0 %v138
    %v197 = vpop.f32.mrf.mxu0
    %v198 = vadd.f32 %v80, %v197
    %199 = vmatmul.f32.gmra.mxu0 %v141
    %v200 = vpop.f32.mrf.mxu0
    %v201 = vadd.f32 %v85, %v200
    %202 = vmatmul.f32.gmra.mxu0 %v144
    %v203 = vpop.f32.mrf.mxu0
    %v204 = vadd.f32 %v90, %v203
    %205 = vmatmul.f32.gmra.mxu0 %v147
    %v206 = vpop.f32.mrf.mxu0
    %v207 = vadd.f32 %v95, %v206
    %208 = vmatmul.f32.gmra.mxu0 %v150
    %v209 = vpop.f32.mrf.mxu0
    %v210 = vadd.f32 %v100, %v209
    %211 = vmatmul.f32.gmra.mxu0 %v153
    %v212 = vpop.f32.mrf.mxu0
    %v213 = vadd.f32 %v105, %v212
    %214 = vmatmul.f32.gmra.mxu0 %v156
    %v215 = vpop.f32.mrf.mxu0
    %v216 = vadd.f32 %v110, %v215
    %217 = vmatmul.f32.gmra.mxu0 %v159
    %v218 = vpop.f32.mrf.mxu0
    %v219 = vadd.f32 %v115, %v218
    %220 = vmatmul.f32.gmra.mxu0 %v162
    %v221 = vpop.f32.mrf.mxu0
    %v222 = vadd.f32 %v120, %v221
    %223 = vmatmul.f32.gmra.mxu0 %v165
    %v224 = vpop.f32.mrf.mxu0
    %v225 = vadd.f32 %v125, %v224
    %226 = vdwg.mxu0
    %v227 = vtanh.pop %v189
    %v228 = vtanh.pop %v192
    %v229 = vtanh.pop %v195
    %v230 = vtanh.pop %v198
    %v231 = vtanh.pop %v201
    %v232 = vtanh.pop %v204
    %v233 = vtanh.pop %v207
    %v234 = vtanh.pop %v210
    %v235 = vtanh.pop %v213
    %v236 = vtanh.pop %v216
    %v237 = vtanh.pop %v219
    %v238 = vtanh.pop %v222
    %v239 = vtanh.pop %v225
    %v240 = vld [vmem:[%s3] sm:$0xff]
    %v241 = vld [vmem:[%s3 + $0x8] sm:$0xff]
    %v242 = vld [vmem:[%s3 + $0x10] sm:$0xff]
    %v243 = vld [vmem:[%s3 + $0x18] sm:$0xff]
    %v244 = vld [vmem:[%s3 + $0x20] sm:$0xff]
    %v245 = vld [vmem:[%s3 + $0x28] sm:$0xff]
    %v246 = vld [vmem:[%s3 + $0x30] sm:$0x3]
    %v247 = vld [vmem:[%s4] sm:$0xff]
    %v248 = vld [vmem:[%s4 + $0x8] sm:$0xff]
    %v249 = vld [vmem:[%s4 + $0x10] sm:$0xff]
    %v250 = vld [vmem:[%s4 + $0x18] sm:$0xff]
    %v251 = vld [vmem:[%s4 + $0x20] sm:$0xff]
    %v252 = vld [vmem:[%s4 + $0x28] sm:$0xff]
    %v253 = vld [vmem:[%s4 + $0x30] sm:$0x3]
    %255 = vset.pattern.permute.xlu0 0
    %256 = vperm.xlu0 %255, %v247
    %v257 = vpop.permute.xlu0 %256
    %260 = vset.pattern.permute.xlu0 0
    %261 = vperm.xlu0 %260, %v248
    %v262 = vpop.permute.xlu0 %261
    %265 = vset.pattern.permute.xlu0 0
    %266 = vperm.xlu0 %265, %v249
    %v267 = vpop.permute.xlu0 %266
    %270 = vset.pattern.permute.xlu0 0
    %271 = vperm.xlu0 %270, %v250
    %v272 = vpop.permute.xlu0 %271
    %275 = vset.pattern.permute.xlu0 0
    %276 = vperm.xlu0 %275, %v251
    %v277 = vpop.permute.xlu0 %276
    %280 = vset.pattern.permute.xlu0 0
    %281 = vperm.xlu0 %280, %v252
    %v282 = vpop.permute.xlu0 %281
    %285 = vset.pattern.permute.xlu0 0
    %286 = vperm.xlu0 %285, %v253
    %v287 = vpop.permute.xlu0 %286
    %vm289 = vcmask 818176
    %v291 = vsel %vm289, %v240, 0
    %v294 = vsel %vm289, %v241, 0
    %v297 = vsel %vm289, %v242, 0
    %v300 = vsel %vm289, %v243, 0
    %v303 = vsel %vm289, %v244, 0
    %v306 = vsel %vm289, %v245, 0
    %v309 = vsel %vm289, %v246, 0
    %vm311 = vcmask 1043456
    %v313 = vsel %vm311, %v239, 0
    %315 = vmatpush.msra.mxu0 0.0
    %316 = vmatpush.msra.mxu0 0.0
    %317 = vmatpush.msra.mxu0 0.0
    %318 = vmatpush.msra.mxu0 %v313
    %319 = vmatpush.msra.mxu0 %v238
    %320 = vmatpush.msra.mxu0 %v237
    %321 = vmatpush.msra.mxu0 %v236
    %322 = vmatpush.msra.mxu0 %v235
    %323 = vmatpush.msra.mxu0 %v234
    %324 = vmatpush.msra.mxu0 %v233
    %325 = vmatpush.msra.mxu0 %v232
    %326 = vmatpush.msra.mxu0 %v231
    %327 = vmatpush.msra.mxu0 %v230
    %328 = vmatpush.msra.mxu0 %v229
    %329 = vmatpush.msra.mxu0 %v228
    %330 = vmatpush.msra.mxu0 %v227
    %331 = vmatmul.f32.gmra.mxu0 %v291
    %v332 = vpop.f32.mrf.mxu0
    %v333 = vadd.f32 %v257, %v332
    %334 = vmatmul.f32.gmra.mxu0 %v294
    %v335 = vpop.f32.mrf.mxu0
    %v336 = vadd.f32 %v262, %v335
    %337 = vmatmul.f32.gmra.mxu0 %v297
    %v338 = vpop.f32.mrf.mxu0
    %v339 = vadd.f32 %v267, %v338
    %340 = vmatmul.f32.gmra.mxu0 %v300
    %v341 = vpop.f32.mrf.mxu0
    %v342 = vadd.f32 %v272, %v341
    %343 = vmatmul.f32.gmra.mxu0 %v303
    %v344 = vpop.f32.mrf.mxu0
    %v345 = vadd.f32 %v277, %v344
    %346 = vmatmul.f32.gmra.mxu0 %v306
    %v347 = vpop.f32.mrf.mxu0
    %v348 = vadd.f32 %v282, %v347
    %349 = vmatmul.f32.gmra.mxu0 %v309
    %v350 = vpop.f32.mrf.mxu0
    %v351 = vadd.f32 %v287, %v350
    %352 = vdwg.mxu0
    %v353 = vtanh.pop %v333
    %v354 = vtanh.pop %v336
    %v355 = vtanh.pop %v339
    %v356 = vtanh.pop %v342
    %v357 = vtanh.pop %v345
    %v358 = vtanh.pop %v348
    %v359 = vtanh.pop %v351
    %v360 = vld [vmem:[%s5] sm:$0xff]
    %v361 = vld [vmem:[%s5 + $0x8] sm:$0x3]
    %v362 = vld [vmem:[%s6] sm:$0xff]
    %v363 = vld [vmem:[%s6 + $0x8] sm:$0x3]
    %365 = vset.pattern.permute.xlu0 0
    %366 = vperm.xlu0 %365, %v362
    %v367 = vpop.permute.xlu0 %366
    %370 = vset.pattern.permute.xlu0 0
    %371 = vperm.xlu0 %370, %v363
    %v372 = vpop.permute.xlu0 %371
    %vm374 = vcmask 408576
    %v376 = vsel %vm374, %v360, 0
    %v379 = vsel %vm374, %v361, 0
    %vm381 = vcmask 1041408
    %v383 = vsel %vm381, %v359, 0
    %385 = vmatpush.msra.mxu0 0.0
    %386 = vmatpush.msra.mxu0 0.0
    %387 = vmatpush.msra.mxu0 0.0
    %388 = vmatpush.msra.mxu0 0.0
    %389 = vmatpush.msra.mxu0 0.0
    %390 = vmatpush.msra.mxu0 0.0
    %391 = vmatpush.msra.mxu0 0.0
    %392 = vmatpush.msra.mxu0 0.0
    %393 = vmatpush.msra.mxu0 0.0
    %394 = vmatpush.msra.mxu0 %v383
    %395 = vmatpush.msra.mxu0 %v358
    %396 = vmatpush.msra.mxu0 %v357
    %397 = vmatpush.msra.mxu0 %v356
    %398 = vmatpush.msra.mxu0 %v355
    %399 = vmatpush.msra.mxu0 %v354
    %400 = vmatpush.msra.mxu0 %v353
    %401 = vmatmul.f32.gmra.mxu0 %v376
    %v402 = vpop.f32.mrf.mxu0
    %v403 = vadd.f32 %v367, %v402
    %404 = vmatmul.f32.gmra.mxu0 %v379
    %v405 = vpop.f32.mrf.mxu0
    %v406 = vadd.f32 %v372, %v405
    %407 = vdwg.mxu0
    %v408 = vtanh.pop %v403
    %v409 = vtanh.pop %v406
    %v410 = vld [vmem:[%s7] sm:$0x1]
    %v411 = vld [vmem:[#allocation2] sm:$0x1]
    %413 = vset.pattern.permute.xlu0 0
    %414 = vperm.xlu0 %413, %v411
    %v415 = vpop.permute.xlu0 %414
    %v417 = vperm.slane %v415, 0
    %vm418 = vcmask 80896
    %v420 = vsel %vm418, %v410, 0
    %v423 = vsel %vm381, %v409, 0
    %425 = vmatpush.msra.mxu0 0.0
    %426 = vmatpush.msra.mxu0 0.0
    %427 = vmatpush.msra.mxu0 0.0
    %428 = vmatpush.msra.mxu0 0.0
    %429 = vmatpush.msra.mxu0 0.0
    %430 = vmatpush.msra.mxu0 0.0
    %431 = vmatpush.msra.mxu0 0.0
    %432 = vmatpush.msra.mxu0 0.0
    %433 = vmatpush.msra.mxu0 0.0
    %434 = vmatpush.msra.mxu0 0.0
    %435 = vmatpush.msra.mxu0 0.0
    %436 = vmatpush.msra.mxu0 0.0
    %437 = vmatpush.msra.mxu0 0.0
    %438 = vmatpush.msra.mxu0 0.0
    %439 = vmatpush.msra.mxu0 %v423
    %440 = vmatpush.msra.mxu0 %v408
    %441 = vmatmul.f32.gmra.mxu0 %v420
    %v442 = vpop.f32.mrf.mxu0
    %v443 = vadd.f32 %v417, %v442
    %444 = vdwg.mxu0
    %445 = vst [vmem:[#allocation3] sm:$0x1] %v443
    // Predicated region
    $region38: #{tpu_custom_call.1} parent=1 // pred_check
      _
    $region39: #{tpu_custom_call.1} parent=1 // pred_check_branch
      %447 = sbr.rel (0) target = $region41
    $region40: #{tpu_custom_call.1} parent=1 // pred_region
      %449 = vsyncadd [#allocation4], 0
      %s451 = sshll.u32 [#allocation3], 4
      %s452 = int_to_ptr.vmem [resolvable:$true] %s451
      %s453 = sshll.u32 %s9, 4
      %s454 = int_to_ptr.hbm [resolvable:$true] %s453
      %456 = dma.vmem_to_hbm [thread:$0]  %s452, 16, %s454, [#allocation4]
    $region41: #{tpu_custom_call.1} parent=1 // pred_fallthru
      _
    // Predicated region
    $region42: #{tpu_custom_call.1} parent=1 // pred_check
      _
    $region43: #{tpu_custom_call.1} parent=1 // pred_check_branch
      %458 = sbr.rel (0) target = $region45
    $region44: #{tpu_custom_call.1} parent=1 // pred_region
      %460 = dma.done [#allocation4], 16
    $region45: #{tpu_custom_call.1} parent=1 // pred_fallthru
      _
    %461 = vsyncpa [#allocation4], 1

</llo_original>
